<compile_context>
chip_gen: v7x
topology: tpu7x:2x2x1
jax: 0.10.0
libtpu: 0.0.40
codegen_flags: <defaults>
</compile_context>

<pallas_src>
import functools

import jax
import jax.numpy as jnp
from jax.experimental import pallas as pl
from jax.experimental.pallas import tpu as pltpu

LANE = 128
SUBLANE = 8


def _round_up(x, m):
    return ((x + m - 1) // m) * m


def mlp_kernel(tok_ref, fused_ref, b1_ref, w2_ref, b2_ref, out_ref,
               *, tb, seq_len, seq_len_pad, vocab_pad):
    """One grid step = `tb` batch rows (= tb * seq_len_pad token positions).

    tok_ref   : [tb*seq_len_pad, 1] int32  token ids (pad rows hold id 0)
    fused_ref : [vocab_pad, H_pad]  bf16   bf16(f32(emb @ w1)), zero padded
    b1_ref    : [1, H_pad]          f32
    w2_ref    : [H_pad, C_pad]      bf16   Linear2 weight, [in, out] layout
    b2_ref    : [1, C_pad]          f32
    out_ref   : [tb, C_pad]         f32    logits (padded class cols are 0)
    """
    rows = tb * seq_len_pad
    tok = tok_ref[...]                                             # [R, 1] i32

    # Fused Embedding+Linear1 gather as an exact one-hot bf16 MXU matmul; the
    # whole fused table is VMEM-resident at this vocab size.  f32 accumulation
    # is pinned so the result feeds the f32 VPU chain directly.
    # TODO(synk): for large vocabularies replace this with a scalar-prefetch /
    # manual-DMA row gather (and set vmem_limit_bytes) instead of a
    # VMEM-resident one-hot matmul.
    vocab_iota = jax.lax.broadcasted_iota(jnp.int32, (rows, vocab_pad), 1)
    onehot = (tok == vocab_iota).astype(jnp.bfloat16)              # [R, Vp]
    h = jnp.dot(onehot, fused_ref[...],
                preferred_element_type=jnp.float32)                # [R, Hp] f32 (exact row pick)

    # Bias + ReLU in f32 on the VPU (v5e has no bf16 VALU path).
    h = jnp.maximum(h + b1_ref[...], 0.0)                          # [R, Hp] f32

    # permute(0,2,1) + max_pool1d(L) + squeeze(2)  ==  max over the seq axis.
    # seq_len_pad is a multiple of 8, so this regroup is sublane-aligned
    # (no relayout copy).
    h3 = h.reshape(tb, seq_len_pad, h.shape[-1])
    if seq_len_pad != seq_len:
        # Padded seq positions gathered a real row (token id 0); zero them out
        # before the max (safe post-ReLU: real values are >= 0).
        pos = jax.lax.broadcasted_iota(jnp.int32, h3.shape, 1)
        h3 = jnp.where(pos < seq_len, h3, 0.0)
    pooled = jnp.max(h3, axis=1)                                   # [tb, Hp] f32

    # Linear2 on the MXU with a lane-dense (128-wide) padded class dim.
    logits = jnp.dot(pooled.astype(jnp.bfloat16), w2_ref[...],
                     preferred_element_type=jnp.float32) + b2_ref[...]
    out_ref[...] = logits                                          # [tb, Cp] f32


def _pad2d(a, rows, cols, dtype):
    a = jnp.asarray(a, dtype)
    out = jnp.zeros((rows, cols), dtype)
    return out.at[:a.shape[0], :a.shape[1]].set(a)


def _choose_tile_batches(batch, seq_len_pad, target_rows=2048):
    """Batch rows per grid step.

    ~2048 token rows per tile amortizes the ~0.35 us/step overhead (per-tile
    VMEM stays at a couple of MiB), tb is kept a multiple of 8 so tiled blocks
    stay (8,128)-aligned, and tb is capped at ~half the batch so there are at
    least 2 grid steps for v7x's two TensorCores to share.
    """
    if batch <= 8:
        return batch                       # single tiny tile; can't split anyway
    tb = max(8, min(batch, target_rows // max(seq_len_pad, 1)))
    tb = max(8, (tb // 8) * 8)
    half = _round_up(pl.cdiv(batch, 2), 8)  # ensure >= 2 grid tiles (v7x megacore)
    return min(tb, max(8, half))


def mlp_forward(token_ids, emb_table, w1, b1, w2, b2):
    """token_ids: [B, L] int; weights in [in, out] layout; returns [B, C] f32."""
    B, L = token_ids.shape
    V, E = emb_table.shape
    H = w1.shape[1]
    C = w2.shape[1]

    v_pad = _round_up(V, LANE)
    h_pad = _round_up(H, LANE)
    c_pad = _round_up(C, LANE)
    l_pad = _round_up(L, SUBLANE)

    tb = _choose_tile_batches(B, l_pad)
    b_pad = _round_up(B, tb)
    num_tiles = b_pad // tb

    # Fold Linear1 into the embedding table (single bf16 rounding of the f32
    # product), then pad.  Done once at init time in production.
    fused = jnp.dot(emb_table.astype(jnp.float32), w1.astype(jnp.float32))
    fused_p = _pad2d(fused, v_pad, h_pad, jnp.bfloat16)
    w2_p = _pad2d(w2, h_pad, c_pad, jnp.bfloat16)
    b1_p = _pad2d(jnp.reshape(b1, (1, H)), 1, h_pad, jnp.float32)
    b2_p = _pad2d(jnp.reshape(b2, (1, C)), 1, c_pad, jnp.float32)

    tok = jnp.zeros((b_pad, l_pad), jnp.int32)
    tok = tok.at[:B, :L].set(token_ids.astype(jnp.int32))
    tok = tok.reshape(b_pad * l_pad, 1)

    kernel = functools.partial(mlp_kernel, tb=tb, seq_len=L,
                               seq_len_pad=l_pad, vocab_pad=v_pad)

    out = pl.pallas_call(
        kernel,
        out_shape=jax.ShapeDtypeStruct((b_pad, c_pad), jnp.float32),
        grid_spec=pltpu.PrefetchScalarGridSpec(
            num_scalar_prefetch=0,
            grid=(num_tiles,),
            in_specs=[
                pl.BlockSpec((tb * l_pad, 1), lambda i: (i, 0)),   # token ids
                pl.BlockSpec((v_pad, h_pad), lambda i: (0, 0)),    # fused emb@w1 (resident)
                pl.BlockSpec((1, h_pad), lambda i: (0, 0)),        # b1
                pl.BlockSpec((h_pad, c_pad), lambda i: (0, 0)),    # w2 (resident)
                pl.BlockSpec((1, c_pad), lambda i: (0, 0)),        # b2
            ],
            out_specs=pl.BlockSpec((tb, c_pad), lambda i: (i, 0)),
        ),
        compiler_params=pltpu.CompilerParams(
            dimension_semantics=("parallel",)),  # megacore-shardable on v7x
    )(tok, fused_p, b1_p, w2_p, b2_p)

    # Slice off batch / class padding (lane-dense store inside, narrow outside).
    return out[:B, :C]


def reference_forward(token_ids, emb_table, w1, b1, w2, b2):
    """Full-f32 plain-JAX reference matching the PyTorch forward."""
    x = jnp.take(emb_table, token_ids.astype(jnp.int32), axis=0)       # [B,L,E]
    h = jnp.maximum(jnp.einsum("ble,eh->blh", x, w1) + b1, 0.0)        # [B,L,H]
    pooled = jnp.max(h, axis=1)                                        # [B,H]
    return jnp.dot(pooled, w2) + b2                                    # [B,C]


def matched_reference(token_ids, emb_table, w1, b1, w2, b2):
    """Reference mirroring the kernel's fused-table / bf16 MXU numerics."""
    fused = jnp.dot(emb_table.astype(jnp.float32),
                    w1.astype(jnp.float32)).astype(jnp.bfloat16)
    h = jnp.take(fused, token_ids.astype(jnp.int32), axis=0).astype(jnp.float32)
    h = jnp.maximum(h + b1, 0.0)
    pooled = jnp.max(h, axis=1)
    return jnp.dot(pooled.astype(jnp.bfloat16), w2.astype(jnp.bfloat16),
                   preferred_element_type=jnp.float32) + b2


if __name__ == "__main__":
    # Config (from model_config): embedding_dim=50, hidden_size=100, n_classes=2
    VOCAB = 100
    EMBED = 50
    HIDDEN = 100
    NCLASS = 2
    B, L = 2, 8

    key = jax.random.PRNGKey(0)
    k_emb, k_w1, k_b1, k_w2, k_b2, k_tok, k_tok2 = jax.random.split(key, 7)

    # Deterministic init matching torch.nn.init.normal_(p, mean=0, std=0.01)
    emb_table = 0.01 * jax.random.normal(k_emb, (VOCAB, EMBED), jnp.float32)
    w1 = 0.01 * jax.random.normal(k_w1, (EMBED, HIDDEN), jnp.float32)   # [in, out]
    b1 = 0.01 * jax.random.normal(k_b1, (HIDDEN,), jnp.float32)
    w2 = 0.01 * jax.random.normal(k_w2, (HIDDEN, NCLASS), jnp.float32)  # [in, out]
    b2 = 0.01 * jax.random.normal(k_b2, (NCLASS,), jnp.float32)

    token_ids = jax.random.randint(k_tok, (B, L), 0, VOCAB, jnp.int32)

    out = jax.block_until_ready(mlp_forward(token_ids, emb_table, w1, b1, w2, b2))
    assert out.shape == (B, NCLASS)

    # Tight check against a reference that mirrors the kernel's numerics path.
    ref_m = matched_reference(token_ids, emb_table, w1, b1, w2, b2)
    assert jnp.allclose(out, ref_m, atol=1e-5, rtol=1e-4), (out, ref_m)

    # Looser sanity check against the full-f32 reference (bf16 cast error only).
    ref_f32 = reference_forward(token_ids, emb_table, w1, b1, w2, b2)
    assert jnp.allclose(out, ref_f32, atol=1e-3, rtol=1e-2), (out, ref_f32)

    # Second shape: non-multiple-of-8 seq length + odd batch, exercising the
    # padded-seq masking before the max-pool and the batch-padding path.
    B2, L2 = 3, 5
    token_ids2 = jax.random.randint(k_tok2, (B2, L2), 0, VOCAB, jnp.int32)
    out2 = jax.block_until_ready(mlp_forward(token_ids2, emb_table, w1, b1, w2, b2))
    ref2 = matched_reference(token_ids2, emb_table, w1, b1, w2, b2)
    assert out2.shape == (B2, NCLASS)
    assert jnp.allclose(out2, ref2, atol=1e-5, rtol=1e-4), (out2, ref2)

    print("KERNEL_OK")
</pallas_src>

<mosaic_0001>
module attributes {stable_mosaic.version = 11 : i64} {
  func.func @mlp_kernel(%arg0: i32, %arg1: memref<16x1xi32, #tpu.memory_space<vmem>>, %arg2: memref<128x128xbf16, #tpu.memory_space<vmem>>, %arg3: memref<1x128xf32, #tpu.memory_space<vmem>>, %arg4: memref<128x128xbf16, #tpu.memory_space<vmem>>, %arg5: memref<1x128xf32, #tpu.memory_space<vmem>>, %arg6: memref<2x128xf32, #tpu.memory_space<vmem>>) attributes {dimension_semantics = [#tpu.dimension_semantics<parallel>], iteration_bounds = array<i64: 1>, scalar_prefetch = 0 : i64, scratch_operands = 0 : i64, tpu.core_type = #tpu.core_type<tc>, window_params = [{transform_indices = @transform_0, window_bounds = array<i64: 16, 1>}, {pipeline_mode = #tpu.pipeline_mode<synchronous>, transform_indices = @transform_1, window_bounds = array<i64: 128, 128>}, {pipeline_mode = #tpu.pipeline_mode<synchronous>, transform_indices = @transform_2, window_bounds = array<i64: 1, 128>}, {pipeline_mode = #tpu.pipeline_mode<synchronous>, transform_indices = @transform_3, window_bounds = array<i64: 128, 128>}, {pipeline_mode = #tpu.pipeline_mode<synchronous>, transform_indices = @transform_4, window_bounds = array<i64: 1, 128>}, {transform_indices = @transform_5, window_bounds = array<i64: 2, 128>}]} {
    %c0 = arith.constant 0 : index
    %c0_0 = arith.constant 0 : index
    %0 = vector.load %arg1[%c0, %c0_0] : memref<16x1xi32, #tpu.memory_space<vmem>>, vector<16x1xi32>
    %1 = tpu.iota {dimensions = array<i32: 1>} : vector<16x128xi32>
    %2 = vector.broadcast %0 : vector<16x1xi32> to vector<16x128xi32>
    %3 = arith.cmpi eq, %2, %1 : vector<16x128xi32>
    %4 = arith.extui %3 : vector<16x128xi1> to vector<16x128xi32>
    %5 = arith.sitofp %4 : vector<16x128xi32> to vector<16x128xf32>
    %6 = arith.truncf %5 : vector<16x128xf32> to vector<16x128xbf16>
    %c0_1 = arith.constant 0 : index
    %c0_2 = arith.constant 0 : index
    %7 = vector.load %arg2[%c0_1, %c0_2] : memref<128x128xbf16, #tpu.memory_space<vmem>>, vector<128x128xbf16>
    %cst = arith.constant dense<0.000000e+00> : vector<16x128xf32>
    %8 = tpu.matmul %6, %7, %cst {dimension_numbers = #tpu.dot_dimension_numbers<[1], [0], [0], [1], [0, 0, 1, 1], [], []>} : vector<16x128xbf16>, vector<128x128xbf16>, vector<16x128xf32> -> vector<16x128xf32>
    %c0_3 = arith.constant 0 : index
    %c0_4 = arith.constant 0 : index
    %9 = vector.load %arg3[%c0_3, %c0_4] : memref<1x128xf32, #tpu.memory_space<vmem>>, vector<1x128xf32>
    %10 = vector.broadcast %9 : vector<1x128xf32> to vector<16x128xf32>
    %11 = arith.addf %8, %10 : vector<16x128xf32>
    %cst_5 = arith.constant 0.000000e+00 : f32
    %12 = vector.broadcast %cst_5 : f32 to vector<16x128xf32>
    %13 = arith.maximumf %11, %12 : vector<16x128xf32>
    %14 = vector.shape_cast %13 : vector<16x128xf32> to vector<2x8x128xf32>
    %cst_6 = arith.constant dense<0xFF800000> : vector<2x128xf32>
    %15 = vector.multi_reduction <maximumf>, %14, %cst_6 [1] : vector<2x8x128xf32> to vector<2x128xf32>
    %16 = arith.truncf %15 : vector<2x128xf32> to vector<2x128xbf16>
    %c0_7 = arith.constant 0 : index
    %c0_8 = arith.constant 0 : index
    %17 = vector.load %arg4[%c0_7, %c0_8] : memref<128x128xbf16, #tpu.memory_space<vmem>>, vector<128x128xbf16>
    %cst_9 = arith.constant dense<0.000000e+00> : vector<2x128xf32>
    %18 = tpu.matmul %16, %17, %cst_9 {dimension_numbers = #tpu.dot_dimension_numbers<[1], [0], [0], [1], [0, 0, 1, 1], [], []>} : vector<2x128xbf16>, vector<128x128xbf16>, vector<2x128xf32> -> vector<2x128xf32>
    %c0_10 = arith.constant 0 : index
    %c0_11 = arith.constant 0 : index
    %19 = vector.load %arg5[%c0_10, %c0_11] : memref<1x128xf32, #tpu.memory_space<vmem>>, vector<1x128xf32>
    %20 = vector.broadcast %19 : vector<1x128xf32> to vector<2x128xf32>
    %21 = arith.addf %18, %20 : vector<2x128xf32>
    %c0_12 = arith.constant 0 : index
    %c0_13 = arith.constant 0 : index
    %22 = vector.load %arg6[%c0_12, %c0_13] : memref<2x128xf32, #tpu.memory_space<vmem>>, vector<2x128xf32>
    tpu.vector_store %arg6[%c0_12, %c0_13], %21 {strides = array<i32>} : memref<2x128xf32, #tpu.memory_space<vmem>>, vector<2x128xf32>,
    return
  }
  func.func @transform_0(%arg0: i32) -> (i32, i32) {
    %c0_i32 = arith.constant 0 : i32
    %c0_i32_0 = arith.constant 0 : i32
    return %arg0, %c0_i32 : i32, i32
  }
  func.func @transform_1(%arg0: i32) -> (i32, i32) {
    %c0_i32 = arith.constant 0 : i32
    %c0_i32_0 = arith.constant 0 : i32
    %c0_i32_1 = arith.constant 0 : i32
    return %c0_i32, %c0_i32_0 : i32, i32
  }
  func.func @transform_2(%arg0: i32) -> (i32, i32) {
    %c0_i32 = arith.constant 0 : i32
    %c0_i32_0 = arith.constant 0 : i32
    %c0_i32_1 = arith.constant 0 : i32
    return %c0_i32, %c0_i32_0 : i32, i32
  }
  func.func @transform_3(%arg0: i32) -> (i32, i32) {
    %c0_i32 = arith.constant 0 : i32
    %c0_i32_0 = arith.constant 0 : i32
    %c0_i32_1 = arith.constant 0 : i32
    return %c0_i32, %c0_i32_0 : i32, i32
  }
  func.func @transform_4(%arg0: i32) -> (i32, i32) {
    %c0_i32 = arith.constant 0 : i32
    %c0_i32_0 = arith.constant 0 : i32
    %c0_i32_1 = arith.constant 0 : i32
    return %c0_i32, %c0_i32_0 : i32, i32
  }
  func.func @transform_5(%arg0: i32) -> (i32, i32) {
    %c0_i32 = arith.constant 0 : i32
    %c0_i32_0 = arith.constant 0 : i32
    return %arg0, %c0_i32 : i32, i32
  }
}

</mosaic_0001>

<llo_original>
// kernel: tpu_custom_call.1
$region0: #{tpu_custom_call.1}
  #allocation0 [shape = 'u32[]', space=smem, size = 0x4, offset = 0x4, fixed_abs, tag = 'smem constant byte address 0x4 - core index']
  #allocation1 [shape = 'u32[144,128]{1,0:T(1,128)}', space=vmem, size = 0x12000, scoped, tag = 'internal scratch']
  %s0 = inlined_call_operand.vmem [shape: s32[16,1], index: 0, kind: input, shape index: {}]
  %s1 = inlined_call_operand.hbm [shape: bf16[128,128], index: 1, kind: input, shape index: {}]
  %s2 = inlined_call_operand.vmem [shape: f32[1,128], index: 2, kind: input, shape index: {}]
  %s3 = inlined_call_operand.hbm [shape: bf16[128,128], index: 3, kind: input, shape index: {}]
  %s4 = inlined_call_operand.vmem [shape: f32[1,128], index: 4, kind: input, shape index: {}]
  %s5 = inlined_call_operand.hbm [shape: f32[2,128], index: 5, kind: output, shape index: {}]
  %s6 = sld [smem:[#allocation0]]
  $region38: #{tpu_custom_call.1} parent=0
    _
  %s8 = ssub.s32 1, %s6
  %s9 = scalar_select 0, %s8, %s6
  $region1: #{tpu_custom_call.1} parent=0
    #allocation2 [shape = 'u8[32768]{0}', space=vmem, size = 0x8000, scoped, tag = 'input window, operand 1, single buffered']
    #allocation3 [shape = 's32[1]{0}', space=sflag, size = 0x4, scoped, tag = 'scoped memory for tpu_custom_call.1']
    #allocation4 [shape = 's32[1]{0}', space=sflag, size = 0x4, scoped, tag = 'scoped memory for tpu_custom_call.1']
    #allocation5 [shape = 'u8[32768]{0}', space=vmem, size = 0x8000, scoped, tag = 'input window, operand 3, single buffered']
    #allocation6 [shape = 's32[1]{0}', space=sflag, size = 0x4, scoped, tag = 'scoped memory for tpu_custom_call.1']
    #allocation7 [shape = 'u8[1024]{0}', space=vmem, size = 0x400, scoped, tag = 'output window, operand 0, single buffered']
    %10 = vsyncpa [#allocation3], 0
    %11 = vsyncpa [#allocation6], 0
    %12 = vsyncpa [#allocation4], 0
    // Predicated region
    $region2: #{tpu_custom_call.1} parent=1 // pred_check
      _
    $region3: #{tpu_custom_call.1} parent=1 // pred_check_branch
      %14 = sbr.rel (0) target = $region5
    $region4: #{tpu_custom_call.1} parent=1 // pred_region
      _
    $region5: #{tpu_custom_call.1} parent=1 // pred_fallthru
      _
    // Predicated region
    $region6: #{tpu_custom_call.1} parent=1 // pred_check
      _
    $region7: #{tpu_custom_call.1} parent=1 // pred_check_branch
      %16 = sbr.rel (0) target = $region9
    $region8: #{tpu_custom_call.1} parent=1 // pred_region
      %s18 = ssub.s32 1024, 1024
      %19 = vsyncadd [#allocation3], %s18
      %s20 = sshll.u32 [#allocation2], 4
      %s21 = int_to_ptr.vmem [resolvable:$true] %s20
      %26 = dma.hbm_to_vmem [thread:$0]  %s1, 1024, %s21, [#allocation3], 64, 64, 4
    $region9: #{tpu_custom_call.1} parent=1 // pred_fallthru
      _
    // Predicated region
    $region10: #{tpu_custom_call.1} parent=1 // pred_check
      _
    $region11: #{tpu_custom_call.1} parent=1 // pred_check_branch
      %28 = sbr.rel (0) target = $region13
    $region12: #{tpu_custom_call.1} parent=1 // pred_region
      _
    $region13: #{tpu_custom_call.1} parent=1 // pred_fallthru
      _
    // Predicated region
    $region14: #{tpu_custom_call.1} parent=1 // pred_check
      _
    $region15: #{tpu_custom_call.1} parent=1 // pred_check_branch
      %30 = sbr.rel (0) target = $region17
    $region16: #{tpu_custom_call.1} parent=1 // pred_region
      %s32 = ssub.s32 1024, 1024
      %33 = vsyncadd [#allocation6], %s32
      %s34 = sshll.u32 [#allocation5], 4
      %s35 = int_to_ptr.vmem [resolvable:$true] %s34
      %40 = dma.hbm_to_vmem [thread:$0]  %s3, 1024, %s35, [#allocation6], 64, 64, 4
    $region17: #{tpu_custom_call.1} parent=1 // pred_fallthru
      _
    // Predicated region
    $region18: #{tpu_custom_call.1} parent=1 // pred_check
      _
    $region19: #{tpu_custom_call.1} parent=1 // pred_check_branch
      %42 = sbr.rel (0) target = $region21
    $region20: #{tpu_custom_call.1} parent=1 // pred_region
      _
    $region21: #{tpu_custom_call.1} parent=1 // pred_fallthru
      _
    // Predicated region
    $region22: #{tpu_custom_call.1} parent=1 // pred_check
      _
    $region23: #{tpu_custom_call.1} parent=1 // pred_check_branch
      %44 = sbr.rel (0) target = $region25
    $region24: #{tpu_custom_call.1} parent=1 // pred_region
      %45 = dma.done [#allocation3], 1024
    $region25: #{tpu_custom_call.1} parent=1 // pred_fallthru
      _
    // Predicated region
    $region26: #{tpu_custom_call.1} parent=1 // pred_check
      _
    $region27: #{tpu_custom_call.1} parent=1 // pred_check_branch
      %47 = sbr.rel (0) target = $region29
    $region28: #{tpu_custom_call.1} parent=1 // pred_region
      %48 = dma.done [#allocation6], 1024
    $region29: #{tpu_custom_call.1} parent=1 // pred_fallthru
      _
    %v50 = vld [vmem:[%s0] sm:$0xff]
    %v51 = vld [vmem:[%s0 + $0x8] sm:$0xff]
    %v52 = vlaneseq
    %v53 = vand.u32 %v52, 127
    %54 = vset.pattern.permute.xlu0 0
    %55 = vperm.xlu0 %54, %v50
    %v56 = vpop.permute.xlu0 %55
    %57 = vset.pattern.permute.xlu0 0
    %58 = vperm.xlu0 %57, %v51
    %v59 = vpop.permute.xlu0 %58
    %vm60 = vcmp.eq.s32.totalorder %v56, %v53
    %vm61 = vcmp.eq.s32.totalorder %v59, %v53
    %v62 = vsel %vm60, 1, 0
    %v63 = vsel %vm61, 1, 0
    %v64 = vcvt.s32.f32 %v62
    %v65 = vcvt.s32.f32 %v63
    %v66 = vpack.c.bf16 %v65, %v64
    %v67 = vld [vmem:[#allocation2] sm:$0xf]
    %v68 = vld [vmem:[#allocation2 + $0x4] sm:$0xf]
    %v69 = vld [vmem:[#allocation2 + $0x8] sm:$0xf]
    %v70 = vld [vmem:[#allocation2 + $0xc] sm:$0xf]
    %v71 = vld [vmem:[#allocation2 + $0x10] sm:$0xf]
    %v72 = vld [vmem:[#allocation2 + $0x14] sm:$0xf]
    %v73 = vld [vmem:[#allocation2 + $0x18] sm:$0xf]
    %v74 = vld [vmem:[#allocation2 + $0x1c] sm:$0xf]
    %v75 = vld [vmem:[#allocation2 + $0x20] sm:$0xf]
    %v76 = vld [vmem:[#allocation2 + $0x24] sm:$0xf]
    %v77 = vld [vmem:[#allocation2 + $0x28] sm:$0xf]
    %v78 = vld [vmem:[#allocation2 + $0x2c] sm:$0xf]
    %v79 = vld [vmem:[#allocation2 + $0x30] sm:$0xf]
    %v80 = vld [vmem:[#allocation2 + $0x34] sm:$0xf]
    %v81 = vld [vmem:[#allocation2 + $0x38] sm:$0xf]
    %v82 = vld [vmem:[#allocation2 + $0x3c] sm:$0xf]
    %v83 = vld [vmem:[%s2] sm:$0x1]
    %v85 = vlaneseq
    %v86 = vshrl.u32 %v85, 7
    %v87 = vsub.s32 0, %v86
    %v88 = vrot.slane %v83, %v87
    %v106 = vunpack.c.l.b16 %v67
    %v107 = vunpack.c.l.b16 %v68
    %v108 = vunpack.c.l.b16 %v69
    %v109 = vunpack.c.l.b16 %v70
    %v110 = vunpack.c.l.b16 %v71
    %v111 = vunpack.c.l.b16 %v72
    %v112 = vunpack.c.l.b16 %v73
    %v113 = vunpack.c.l.b16 %v74
    %v114 = vunpack.c.l.b16 %v75
    %v115 = vunpack.c.l.b16 %v76
    %v116 = vunpack.c.l.b16 %v77
    %v117 = vunpack.c.l.b16 %v78
    %v118 = vunpack.c.l.b16 %v79
    %v119 = vunpack.c.l.b16 %v80
    %v120 = vunpack.c.l.b16 %v81
    %v121 = vunpack.c.l.b16 %v82
    %v122 = vpack.c.b16 %v107, %v106
    %v123 = vpack.c.b16 %v109, %v108
    %v124 = vpack.c.b16 %v111, %v110
    %v125 = vpack.c.b16 %v113, %v112
    %v126 = vpack.c.b16 %v115, %v114
    %v127 = vpack.c.b16 %v117, %v116
    %v128 = vpack.c.b16 %v119, %v118
    %v129 = vpack.c.b16 %v121, %v120
    %138 = vmatprep.subr.bf16.mxu0 0
    %139 = vmatpush1.bf16.msra.mxu0 %v122
    %140 = vmatprep.subr.bf16.mxu0 0
    %141 = vmatpush1.bf16.msra.mxu0 %v123
    %142 = vmatprep.subr.bf16.mxu0 0
    %143 = vmatpush1.bf16.msra.mxu0 %v124
    %144 = vmatprep.subr.bf16.mxu0 0
    %145 = vmatpush1.bf16.msra.mxu0 %v125
    %146 = vmatprep.subr.bf16.mxu0 0
    %147 = vmatpush1.bf16.msra.mxu0 %v126
    %148 = vmatprep.subr.bf16.mxu0 0
    %149 = vmatpush1.bf16.msra.mxu0 %v127
    %150 = vmatprep.subr.bf16.mxu0 0
    %151 = vmatpush1.bf16.msra.mxu0 %v128
    %152 = vmatprep.subr.bf16.mxu0 0
    %153 = vmatpush1.bf16.msra.mxu0 %v129
    %154 = vmatprep.subr.bf16.mxu0 0
    %155 = vmatpush1.bf16.msra.mxu0 0
    %156 = vmatprep.subr.bf16.mxu0 0
    %157 = vmatpush1.bf16.msra.mxu0 0
    %158 = vmatprep.subr.bf16.mxu0 0
    %159 = vmatpush1.bf16.msra.mxu0 0
    %160 = vmatprep.subr.bf16.mxu0 0
    %161 = vmatpush1.bf16.msra.mxu0 0
    %162 = vmatprep.subr.bf16.mxu0 0
    %163 = vmatpush1.bf16.msra.mxu0 0
    %164 = vmatprep.subr.bf16.mxu0 0
    %165 = vmatpush1.bf16.msra.mxu0 0
    %166 = vmatprep.subr.bf16.mxu0 0
    %167 = vmatpush1.bf16.msra.mxu0 0
    %168 = vmatprep.subr.bf16.mxu0 0
    %169 = vmatpush1.bf16.msra.mxu0 0
    %170 = vmatprep.mubr.bf16.mxu0 0
    %171 = vmatmul.mubr.bf16.gmra.mrb[0].mxu0 %v66
    %v172 = vpop.f32.mrb[0].mxu0
    %v173 = vadd.f32 %v88, %v172
    %v174 = vpop.f32.mrb[0].mxu0
    %v175 = vpop.f32.mrb[0].mxu0
    %v176 = vadd.f32 %v88, %v175
    %v177 = vpop.f32.mrb[0].mxu0
    %178 = vdwg.mxu0
    %v179 = vmax.f32 %v173, 0.0
    %v180 = vmax.f32 %v176, 0.0
    %v181 = vrot.slane %v179, 4
    %v182 = vmax.f32 %v179, %v181
    %v183 = vrot.slane %v182, 2
    %v184 = vmax.f32 %v182, %v183
    %v185 = vrot.slane %v184, 1
    %v186 = vmax.f32 %v184, %v185
    %v187 = vrot.slane %v180, 4
    %v188 = vmax.f32 %v180, %v187
    %v189 = vrot.slane %v188, 2
    %v190 = vmax.f32 %v188, %v189
    %v191 = vrot.slane %v190, 1
    %v192 = vmax.f32 %v190, %v191
    %v193 = vpack.c.bf16 %v186, %v186
    %v194 = vpack.c.bf16 %v192, %v192
    %v195 = vld [vmem:[#allocation5] sm:$0xf]
    %v196 = vld [vmem:[#allocation5 + $0x4] sm:$0xf]
    %v197 = vld [vmem:[#allocation5 + $0x8] sm:$0xf]
    %v198 = vld [vmem:[#allocation5 + $0xc] sm:$0xf]
    %v199 = vld [vmem:[#allocation5 + $0x10] sm:$0xf]
    %v200 = vld [vmem:[#allocation5 + $0x14] sm:$0xf]
    %v201 = vld [vmem:[#allocation5 + $0x18] sm:$0xf]
    %v202 = vld [vmem:[#allocation5 + $0x1c] sm:$0xf]
    %v203 = vld [vmem:[#allocation5 + $0x20] sm:$0xf]
    %v204 = vld [vmem:[#allocation5 + $0x24] sm:$0xf]
    %v205 = vld [vmem:[#allocation5 + $0x28] sm:$0xf]
    %v206 = vld [vmem:[#allocation5 + $0x2c] sm:$0xf]
    %v207 = vld [vmem:[#allocation5 + $0x30] sm:$0xf]
    %v208 = vld [vmem:[#allocation5 + $0x34] sm:$0xf]
    %v209 = vld [vmem:[#allocation5 + $0x38] sm:$0xf]
    %v210 = vld [vmem:[#allocation5 + $0x3c] sm:$0xf]
    %v211 = vld [vmem:[%s4] sm:$0x1]
    %v213 = vlaneseq
    %v214 = vshrl.u32 %v213, 7
    %v215 = vsub.s32 0, %v214
    %v216 = vrot.slane %v211, %v215
    %v220 = vunpack.c.l.b16 %v193
    %v221 = vunpack.c.l.b16 %v194
    %vm222 = vcmask 1041409
    %v223 = vsel %vm222, %v221, %v220
    %v224 = vpack.c.b16 %v223, %v223
    %v242 = vunpack.c.l.b16 %v195
    %v243 = vunpack.c.l.b16 %v196
    %v244 = vunpack.c.l.b16 %v197
    %v245 = vunpack.c.l.b16 %v198
    %v246 = vunpack.c.l.b16 %v199
    %v247 = vunpack.c.l.b16 %v200
    %v248 = vunpack.c.l.b16 %v201
    %v249 = vunpack.c.l.b16 %v202
    %v250 = vunpack.c.l.b16 %v203
    %v251 = vunpack.c.l.b16 %v204
    %v252 = vunpack.c.l.b16 %v205
    %v253 = vunpack.c.l.b16 %v206
    %v254 = vunpack.c.l.b16 %v207
    %v255 = vunpack.c.l.b16 %v208
    %v256 = vunpack.c.l.b16 %v209
    %v257 = vunpack.c.l.b16 %v210
    %v258 = vpack.c.b16 %v243, %v242
    %v259 = vpack.c.b16 %v245, %v244
    %v260 = vpack.c.b16 %v247, %v246
    %v261 = vpack.c.b16 %v249, %v248
    %v262 = vpack.c.b16 %v251, %v250
    %v263 = vpack.c.b16 %v253, %v252
    %v264 = vpack.c.b16 %v255, %v254
    %v265 = vpack.c.b16 %v257, %v256
    %274 = vmatprep.subr.bf16.mxu0 0
    %275 = vmatpush1.bf16.msra.mxu0 %v258
    %276 = vmatprep.subr.bf16.mxu0 0
    %277 = vmatpush1.bf16.msra.mxu0 %v259
    %278 = vmatprep.subr.bf16.mxu0 0
    %279 = vmatpush1.bf16.msra.mxu0 %v260
    %280 = vmatprep.subr.bf16.mxu0 0
    %281 = vmatpush1.bf16.msra.mxu0 %v261
    %282 = vmatprep.subr.bf16.mxu0 0
    %283 = vmatpush1.bf16.msra.mxu0 %v262
    %284 = vmatprep.subr.bf16.mxu0 0
    %285 = vmatpush1.bf16.msra.mxu0 %v263
    %286 = vmatprep.subr.bf16.mxu0 0
    %287 = vmatpush1.bf16.msra.mxu0 %v264
    %288 = vmatprep.subr.bf16.mxu0 0
    %289 = vmatpush1.bf16.msra.mxu0 %v265
    %290 = vmatprep.subr.bf16.mxu0 0
    %291 = vmatpush1.bf16.msra.mxu0 0
    %292 = vmatprep.subr.bf16.mxu0 0
    %293 = vmatpush1.bf16.msra.mxu0 0
    %294 = vmatprep.subr.bf16.mxu0 0
    %295 = vmatpush1.bf16.msra.mxu0 0
    %296 = vmatprep.subr.bf16.mxu0 0
    %297 = vmatpush1.bf16.msra.mxu0 0
    %298 = vmatprep.subr.bf16.mxu0 0
    %299 = vmatpush1.bf16.msra.mxu0 0
    %300 = vmatprep.subr.bf16.mxu0 0
    %301 = vmatpush1.bf16.msra.mxu0 0
    %302 = vmatprep.subr.bf16.mxu0 0
    %303 = vmatpush1.bf16.msra.mxu0 0
    %304 = vmatprep.subr.bf16.mxu0 0
    %305 = vmatpush1.bf16.msra.mxu0 0
    %306 = vmatprep.mubr.bf16.mxu0 0
    %307 = vmatmul.mubr.bf16.gmra.mrb[0].mxu0 %v224
    %v308 = vpop.f32.mrb[0].mxu0
    %v309 = vadd.f32 %v216, %v308
    %v310 = vpop.f32.mrb[0].mxu0
    %v311 = vpop.f32.mrb[0].mxu0
    %v312 = vpop.f32.mrb[0].mxu0
    %313 = vdwg.mxu0
    %314 = vst [vmem:[#allocation7] sm:$0x3] %v309
    // Predicated region
    $region30: #{tpu_custom_call.1} parent=1 // pred_check
      _
    $region31: #{tpu_custom_call.1} parent=1 // pred_check_branch
      %316 = sbr.rel (0) target = $region33
    $region32: #{tpu_custom_call.1} parent=1 // pred_region
      %s318 = ssub.s32 32, 32
      %319 = vsyncadd [#allocation4], %s318
      %s321 = sshll.u32 [#allocation7], 4
      %s322 = int_to_ptr.vmem [resolvable:$true] %s321
      %324 = dma.vmem_to_hbm [thread:$0]  %s322, 32, %s5, [#allocation4]
    $region33: #{tpu_custom_call.1} parent=1 // pred_fallthru
      _
    // Predicated region
    $region34: #{tpu_custom_call.1} parent=1 // pred_check
      _
    $region35: #{tpu_custom_call.1} parent=1 // pred_check_branch
      %326 = sbr.rel (0) target = $region37
    $region36: #{tpu_custom_call.1} parent=1 // pred_region
      %327 = dma.done [#allocation4], 32
    $region37: #{tpu_custom_call.1} parent=1 // pred_fallthru
      _
    %328 = vsyncpa [#allocation3], 1
    %329 = vsyncpa [#allocation6], 1
    %330 = vsyncpa [#allocation4], 1

</llo_original>
